<compile_context>
chip_gen: v7x
topology: tpu7x:2x2x1
jax: 0.10.0
libtpu: 0.0.40
codegen_flags: <defaults>
</compile_context>

<pallas_src>
import jax
import jax.numpy as jnp
from jax.experimental import pallas as pl
from jax.experimental.pallas import tpu as pltpu

_CPAD = 128      # class dim padded to one vreg lane width for unmasked stores
_NEG = -1e30     # bias for padded logit columns: exp -> 0, never the row max


# ----------------------------------------------------------------------------
# Fused Pallas kernel: fc1 + tanh + fc2 + log_softmax (lane-padded classes)
# ----------------------------------------------------------------------------
def _netfull_kernel(x_ref, w1_ref, b1_ref, w2_ref, b2_ref, o_ref):
    # x: (tm, 784), w1: (784, 256), b1: (1, 256), w2: (256, 128), b2: (1, 128)
    h = jnp.dot(x_ref[...], w1_ref[...], preferred_element_type=jnp.float32)
    h = jnp.tanh(h + b1_ref[...])                         # EUP tanh, f32
    z = jnp.dot(h, w2_ref[...], preferred_element_type=jnp.float32)
    z = z + b2_ref[...]                                   # padded cols ~ -1e30
    # row-wise, max-stabilized log_softmax; padded cols contribute exp()==0
    m = jnp.max(z, axis=-1, keepdims=True)
    e = jnp.exp(z - m)
    lse = jnp.log(jnp.sum(e, axis=-1, keepdims=True)) + m
    o_ref[...] = (z - lse).astype(o_ref.dtype)            # lane-dense (tm,128) store


def _pick_tm(M):
    """Large-M tiles only (never 8/32-row micro-tiles)."""
    if M <= 512:
        return M                      # whole batch in one block
    for t in (512, 256, 128):
        if M % t == 0:
            return t
    return 512                        # cdiv grid; log_softmax is row-wise, so a
                                      # ragged last tile is safe (OOB rows dropped)


def netfull_pallas(x2d, w1_t, b1, w2_t, b2):
    """x2d:(M,784) w1_t:(784,256) b1:(256,) w2_t:(256,10) b2:(10,) -> (M,10)."""
    M, K = x2d.shape
    K1, H = w1_t.shape
    H2, C = w2_t.shape
    assert K == K1 and H == H2

    b1r = b1.reshape(1, H).astype(jnp.float32)
    # Pad class dim 10 -> 128: zero weight columns, -1e30 bias columns.
    w2p = jnp.zeros((H, _CPAD), jnp.float32).at[:, :C].set(w2_t.astype(jnp.float32))
    b2p = jnp.full((1, _CPAD), _NEG, jnp.float32).at[0, :C].set(b2.astype(jnp.float32))

    tm = _pick_tm(M)
    grid = (pl.cdiv(M, tm),)

    out = pl.pallas_call(
        _netfull_kernel,
        out_shape=jax.ShapeDtypeStruct((M, _CPAD), jnp.float32),
        grid=grid,
        in_specs=[
            pl.BlockSpec((tm, K), lambda i: (i, 0)),        # batch tile
            pl.BlockSpec((K, H), lambda i: (0, 0)),         # fc1 weight (VMEM-resident)
            pl.BlockSpec((1, H), lambda i: (0, 0)),         # fc1 bias
            pl.BlockSpec((H, _CPAD), lambda i: (0, 0)),     # fc2 weight (padded)
            pl.BlockSpec((1, _CPAD), lambda i: (0, 0)),     # fc2 bias   (padded)
        ],
        out_specs=pl.BlockSpec((tm, _CPAD), lambda i: (i, 0)),
        compiler_params=pltpu.CompilerParams(
            dimension_semantics=("parallel",)),
    )(x2d.astype(jnp.float32), w1_t.astype(jnp.float32), b1r, w2p, b2p)

    return out[:, :C]                  # drop padded classes (layout plumbing only)


# ----------------------------------------------------------------------------
# Parameters (torch layouts) and forward
# ----------------------------------------------------------------------------
def init_params(key):
    ks = jax.random.split(key, 4)
    s = 0.05
    return {
        # torch nn.Linear layout: weight (out, in), bias (out,)
        "fc1_w": s * jax.random.normal(ks[0], (256, 784), jnp.float32),
        "fc1_b": s * jax.random.normal(ks[1], (256,), jnp.float32),
        "fc2_w": s * jax.random.normal(ks[2], (10, 256), jnp.float32),
        "fc2_b": s * jax.random.normal(ks[3], (10,), jnp.float32),
    }


@jax.jit
def netfull_forward(x, params):
    N = x.shape[0]
    x2d = x.reshape(N, -1)                                 # == torch x.view(N, -1)
    return netfull_pallas(
        x2d,
        params["fc1_w"].T,                                 # (784, 256)
        params["fc1_b"],
        params["fc2_w"].T,                                 # (256, 10)
        params["fc2_b"],
    )


def reference_forward(x, params):
    """Pure-JAX reference of the PyTorch module."""
    xf = x.reshape(x.shape[0], -1)
    h = jnp.tanh(xf @ params["fc1_w"].T + params["fc1_b"])
    z = h @ params["fc2_w"].T + params["fc2_b"]
    return jax.nn.log_softmax(z, axis=1)


if __name__ == "__main__":
    key = jax.random.PRNGKey(0)
    k_x, k_p, k_x2 = jax.random.split(key, 3)
    params = init_params(k_p)

    # fc1 in_features = 784 = 28*28  =>  MNIST-like input [N, 1, 28, 28]
    x = jax.random.normal(k_x, (2, 1, 28, 28), jnp.float32)
    out = jax.block_until_ready(netfull_forward(x, params))
    assert out.shape == (2, 10), out.shape
    # rows of log_softmax exponentiate and sum to ~1
    assert jnp.allclose(jnp.sum(jnp.exp(out), axis=1), 1.0, atol=1e-4)
    ref = reference_forward(x, params)
    assert jnp.allclose(out, ref, atol=2e-2, rtol=2e-2), (
        float(jnp.max(jnp.abs(out - ref))))

    # Exercise the tiled (multi-block, ragged last tile) path as well.
    xb = jax.random.normal(k_x2, (1000, 1, 28, 28), jnp.float32)
    outb = jax.block_until_ready(netfull_forward(xb, params))
    refb = reference_forward(xb, params)
    assert outb.shape == (1000, 10)
    assert jnp.allclose(outb, refb, atol=2e-2, rtol=2e-2), (
        float(jnp.max(jnp.abs(outb - refb))))

    print("KERNEL_OK")
</pallas_src>

<mosaic_0001>
module attributes {stable_mosaic.version = 11 : i64} {
  func.func @_netfull_kernel(%arg0: i32, %arg1: memref<2x784xf32, #tpu.memory_space<vmem>>, %arg2: memref<784x256xf32, #tpu.memory_space<vmem>>, %arg3: memref<1x256xf32, #tpu.memory_space<vmem>>, %arg4: memref<256x128xf32, #tpu.memory_space<vmem>>, %arg5: memref<1x128xf32, #tpu.memory_space<vmem>>, %arg6: memref<2x128xf32, #tpu.memory_space<vmem>>) attributes {dimension_semantics = [#tpu.dimension_semantics<parallel>], iteration_bounds = array<i64: 1>, scalar_prefetch = 0 : i64, scratch_operands = 0 : i64, tpu.core_type = #tpu.core_type<tc>, window_params = [{transform_indices = @transform_0, window_bounds = array<i64: 2, 784>}, {pipeline_mode = #tpu.pipeline_mode<synchronous>, transform_indices = @transform_1, window_bounds = array<i64: 784, 256>}, {pipeline_mode = #tpu.pipeline_mode<synchronous>, transform_indices = @transform_2, window_bounds = array<i64: 1, 256>}, {pipeline_mode = #tpu.pipeline_mode<synchronous>, transform_indices = @transform_3, window_bounds = array<i64: 256, 128>}, {pipeline_mode = #tpu.pipeline_mode<synchronous>, transform_indices = @transform_4, window_bounds = array<i64: 1, 128>}, {transform_indices = @transform_5, window_bounds = array<i64: 2, 128>}]} {
    %c0 = arith.constant 0 : index
    %c0_0 = arith.constant 0 : index
    %0 = vector.load %arg1[%c0, %c0_0] : memref<2x784xf32, #tpu.memory_space<vmem>>, vector<2x784xf32>
    %c0_1 = arith.constant 0 : index
    %c0_2 = arith.constant 0 : index
    %1 = vector.load %arg2[%c0_1, %c0_2] : memref<784x256xf32, #tpu.memory_space<vmem>>, vector<784x256xf32>
    %cst = arith.constant dense<0.000000e+00> : vector<2x256xf32>
    %2 = tpu.matmul %0, %1, %cst {dimension_numbers = #tpu.dot_dimension_numbers<[1], [0], [0], [1], [0, 0, 1, 1], [], []>} : vector<2x784xf32>, vector<784x256xf32>, vector<2x256xf32> -> vector<2x256xf32>
    %c0_3 = arith.constant 0 : index
    %c0_4 = arith.constant 0 : index
    %3 = vector.load %arg3[%c0_3, %c0_4] : memref<1x256xf32, #tpu.memory_space<vmem>>, vector<1x256xf32>
    %4 = vector.broadcast %3 : vector<1x256xf32> to vector<2x256xf32>
    %5 = arith.addf %2, %4 : vector<2x256xf32>
    %6 = math.tanh %5 : vector<2x256xf32>
    %c0_5 = arith.constant 0 : index
    %c0_6 = arith.constant 0 : index
    %7 = vector.load %arg4[%c0_5, %c0_6] : memref<256x128xf32, #tpu.memory_space<vmem>>, vector<256x128xf32>
    %cst_7 = arith.constant dense<0.000000e+00> : vector<2x128xf32>
    %8 = tpu.matmul %6, %7, %cst_7 {dimension_numbers = #tpu.dot_dimension_numbers<[1], [0], [0], [1], [0, 0, 1, 1], [], []>} : vector<2x256xf32>, vector<256x128xf32>, vector<2x128xf32> -> vector<2x128xf32>
    %c0_8 = arith.constant 0 : index
    %c0_9 = arith.constant 0 : index
    %9 = vector.load %arg5[%c0_8, %c0_9] : memref<1x128xf32, #tpu.memory_space<vmem>>, vector<1x128xf32>
    %10 = vector.broadcast %9 : vector<1x128xf32> to vector<2x128xf32>
    %11 = arith.addf %8, %10 : vector<2x128xf32>
    %cst_10 = arith.constant dense<0xFF800000> : vector<2xf32>
    %12 = vector.multi_reduction <maximumf>, %11, %cst_10 [1] : vector<2x128xf32> to vector<2xf32>
    %13 = vector.shape_cast %12 : vector<2xf32> to vector<2x1xf32>
    %14 = vector.broadcast %13 : vector<2x1xf32> to vector<2x128xf32>
    %15 = arith.subf %11, %14 : vector<2x128xf32>
    %16 = math.exp %15 : vector<2x128xf32>
    %cst_11 = arith.constant dense<0.000000e+00> : vector<2xf32>
    %17 = vector.multi_reduction <add>, %16, %cst_11 [1] : vector<2x128xf32> to vector<2xf32>
    %18 = vector.shape_cast %17 : vector<2xf32> to vector<2x1xf32>
    %19 = math.log %18 : vector<2x1xf32>
    %20 = arith.addf %19, %13 : vector<2x1xf32>
    %21 = vector.broadcast %20 : vector<2x1xf32> to vector<2x128xf32>
    %22 = arith.subf %11, %21 : vector<2x128xf32>
    %c0_12 = arith.constant 0 : index
    %c0_13 = arith.constant 0 : index
    %23 = vector.load %arg6[%c0_12, %c0_13] : memref<2x128xf32, #tpu.memory_space<vmem>>, vector<2x128xf32>
    tpu.vector_store %arg6[%c0_12, %c0_13], %22 {strides = array<i32>} : memref<2x128xf32, #tpu.memory_space<vmem>>, vector<2x128xf32>,
    return
  }
  func.func @transform_0(%arg0: i32) -> (i32, i32) {
    %c0_i32 = arith.constant 0 : i32
    %c0_i32_0 = arith.constant 0 : i32
    return %arg0, %c0_i32 : i32, i32
  }
  func.func @transform_1(%arg0: i32) -> (i32, i32) {
    %c0_i32 = arith.constant 0 : i32
    %c0_i32_0 = arith.constant 0 : i32
    %c0_i32_1 = arith.constant 0 : i32
    return %c0_i32, %c0_i32_0 : i32, i32
  }
  func.func @transform_2(%arg0: i32) -> (i32, i32) {
    %c0_i32 = arith.constant 0 : i32
    %c0_i32_0 = arith.constant 0 : i32
    %c0_i32_1 = arith.constant 0 : i32
    return %c0_i32, %c0_i32_0 : i32, i32
  }
  func.func @transform_3(%arg0: i32) -> (i32, i32) {
    %c0_i32 = arith.constant 0 : i32
    %c0_i32_0 = arith.constant 0 : i32
    %c0_i32_1 = arith.constant 0 : i32
    return %c0_i32, %c0_i32_0 : i32, i32
  }
  func.func @transform_4(%arg0: i32) -> (i32, i32) {
    %c0_i32 = arith.constant 0 : i32
    %c0_i32_0 = arith.constant 0 : i32
    %c0_i32_1 = arith.constant 0 : i32
    return %c0_i32, %c0_i32_0 : i32, i32
  }
  func.func @transform_5(%arg0: i32) -> (i32, i32) {
    %c0_i32 = arith.constant 0 : i32
    %c0_i32_0 = arith.constant 0 : i32
    return %arg0, %c0_i32 : i32, i32
  }
}

</mosaic_0001>

<llo_original>
// kernel: netfull_forward.1
$region0: #{netfull_forward.1}
  #allocation0 [shape = 'u32[]', space=smem, size = 0x4, offset = 0x4, fixed_abs, tag = 'smem constant byte address 0x4 - core index']
  #allocation1 [shape = 'u32[144,128]{1,0:T(1,128)}', space=vmem, size = 0x12000, scoped, tag = 'internal scratch']
  %s0 = inlined_call_operand.vmem [shape: f32[2,784], index: 0, kind: input, shape index: {}]
  %s1 = inlined_call_operand.hbm [shape: f32[784,256], index: 1, kind: input, shape index: {}]
  %s2 = inlined_call_operand.vmem [shape: f32[1,256], index: 2, kind: input, shape index: {}]
  %s3 = inlined_call_operand.vmem [shape: f32[256,128], index: 3, kind: input, shape index: {}]
  %s4 = inlined_call_operand.vmem [shape: f32[1,128], index: 4, kind: input, shape index: {}]
  %s5 = inlined_call_operand.hbm [shape: f32[2,128], index: 5, kind: output, shape index: {}]
  %s6 = sld [smem:[#allocation0]]
  $region34: #{netfull_forward.1} parent=0
    _
  %s8 = ssub.s32 1, %s6
  %s9 = scalar_select 0, %s8, %s6
  $region1: #{netfull_forward.1} parent=0
    #allocation2 [shape = 'u8[802816]{0}', space=vmem, size = 0xc4000, scoped, tag = 'input window, operand 1, single buffered']
    #allocation3 [shape = 's32[1]{0}', space=sflag, size = 0x4, scoped, tag = 'scoped memory for netfull_forward.1']
    #allocation4 [shape = 's32[1]{0}', space=sflag, size = 0x4, scoped, tag = 'scoped memory for netfull_forward.1']
    #allocation5 [shape = 'u8[1024]{0}', space=vmem, size = 0x400, scoped, tag = 'output window, operand 0, single buffered']
    %10 = vsyncpa [#allocation3], 0
    %11 = vsyncpa [#allocation4], 0
    // Predicated region
    $region2: #{netfull_forward.1} parent=1 // pred_check
      _
    $region3: #{netfull_forward.1} parent=1 // pred_check_branch
      %13 = sbr.rel (0) target = $region5
    $region4: #{netfull_forward.1} parent=1 // pred_region
      _
    $region5: #{netfull_forward.1} parent=1 // pred_fallthru
      _
    // Predicated region
    $region6: #{netfull_forward.1} parent=1 // pred_check
      _
    $region7: #{netfull_forward.1} parent=1 // pred_check_branch
      %15 = sbr.rel (0) target = $region9
    $region8: #{netfull_forward.1} parent=1 // pred_region
      %s17 = ssub.s32 25088, 25088
      %18 = vsyncadd [#allocation3], %s17
      %s19 = sshll.u32 [#allocation2], 4
      %s20 = int_to_ptr.vmem [resolvable:$true] %s19
      %25 = dma.hbm_to_vmem [thread:$0]  %s1, 25088, %s20, [#allocation3], 256, 256, 16
    $region9: #{netfull_forward.1} parent=1 // pred_fallthru
      _
    // Predicated region
    $region10: #{netfull_forward.1} parent=1 // pred_check
      _
    $region11: #{netfull_forward.1} parent=1 // pred_check_branch
      %27 = sbr.rel (0) target = $region13
    $region12: #{netfull_forward.1} parent=1 // pred_region
      _
    $region13: #{netfull_forward.1} parent=1 // pred_fallthru
      _
    // Predicated region
    $region14: #{netfull_forward.1} parent=1 // pred_check
      _
    $region15: #{netfull_forward.1} parent=1 // pred_check_branch
      %29 = sbr.rel (0) target = $region17
    $region16: #{netfull_forward.1} parent=1 // pred_region
      _
    $region17: #{netfull_forward.1} parent=1 // pred_fallthru
      _
    // Predicated region
    $region18: #{netfull_forward.1} parent=1 // pred_check
      _
    $region19: #{netfull_forward.1} parent=1 // pred_check_branch
      %31 = sbr.rel (0) target = $region21
    $region20: #{netfull_forward.1} parent=1 // pred_region
      _
    $region21: #{netfull_forward.1} parent=1 // pred_fallthru
      _
    // Predicated region
    $region22: #{netfull_forward.1} parent=1 // pred_check
      _
    $region23: #{netfull_forward.1} parent=1 // pred_check_branch
      %33 = sbr.rel (0) target = $region25
    $region24: #{netfull_forward.1} parent=1 // pred_region
      %34 = dma.done [#allocation3], 25088
    $region25: #{netfull_forward.1} parent=1 // pred_fallthru
      _
    %v35 = vld [vmem:[%s0] sm:$0xff]
    %v36 = vld [vmem:[%s0 + $0x8] sm:$0x3f]
    %v37 = vld [vmem:[#allocation2] sm:$0xff]
    %v38 = vld [vmem:[#allocation2 + $0x8] sm:$0xff]
    %v39 = vld [vmem:[#allocation2 + $0x10] sm:$0xff]
    %v40 = vld [vmem:[#allocation2 + $0x18] sm:$0xff]
    %v41 = vld [vmem:[#allocation2 + $0x20] sm:$0xff]
    %v42 = vld [vmem:[#allocation2 + $0x28] sm:$0xff]
    %v43 = vld [vmem:[#allocation2 + $0x30] sm:$0xff]
    %v44 = vld [vmem:[#allocation2 + $0x38] sm:$0xff]
    %v45 = vld [vmem:[#allocation2 + $0x40] sm:$0xff]
    %v46 = vld [vmem:[#allocation2 + $0x48] sm:$0xff]
    %v47 = vld [vmem:[#allocation2 + $0x50] sm:$0xff]
    %v48 = vld [vmem:[#allocation2 + $0x58] sm:$0xff]
    %v49 = vld [vmem:[#allocation2 + $0x60] sm:$0xff]
    %v50 = vld [vmem:[#allocation2 + $0x68] sm:$0xff]
    %v51 = vld [vmem:[#allocation2 + $0x70] sm:$0xff]
    %v52 = vld [vmem:[#allocation2 + $0x78] sm:$0xff]
    %v53 = vld [vmem:[#allocation2 + $0x80] sm:$0xff]
    %v54 = vld [vmem:[#allocation2 + $0x88] sm:$0xff]
    %v55 = vld [vmem:[#allocation2 + $0x90] sm:$0xff]
    %v56 = vld [vmem:[#allocation2 + $0x98] sm:$0xff]
    %v57 = vld [vmem:[#allocation2 + $0xa0] sm:$0xff]
    %v58 = vld [vmem:[#allocation2 + $0xa8] sm:$0xff]
    %v59 = vld [vmem:[#allocation2 + $0xb0] sm:$0xff]
    %v60 = vld [vmem:[#allocation2 + $0xb8] sm:$0xff]
    %v61 = vld [vmem:[#allocation2 + $0xc0] sm:$0xff]
    %v62 = vld [vmem:[#allocation2 + $0xc8] sm:$0xff]
    %v63 = vld [vmem:[#allocation2 + $0xd0] sm:$0xff]
    %v64 = vld [vmem:[#allocation2 + $0xd8] sm:$0xff]
    %v65 = vld [vmem:[#allocation2 + $0xe0] sm:$0xff]
    %v66 = vld [vmem:[#allocation2 + $0xe8] sm:$0xff]
    %v67 = vld [vmem:[#allocation2 + $0xf0] sm:$0xff]
    %v68 = vld [vmem:[#allocation2 + $0xf8] sm:$0xff]
    %v69 = vld [vmem:[#allocation2 + $0x100] sm:$0xff]
    %v70 = vld [vmem:[#allocation2 + $0x108] sm:$0xff]
    %v71 = vld [vmem:[#allocation2 + $0x110] sm:$0xff]
    %v72 = vld [vmem:[#allocation2 + $0x118] sm:$0xff]
    %v73 = vld [vmem:[#allocation2 + $0x120] sm:$0xff]
    %v74 = vld [vmem:[#allocation2 + $0x128] sm:$0xff]
    %v75 = vld [vmem:[#allocation2 + $0x130] sm:$0xff]
    %v76 = vld [vmem:[#allocation2 + $0x138] sm:$0xff]
    %v77 = vld [vmem:[#allocation2 + $0x140] sm:$0xff]
    %v78 = vld [vmem:[#allocation2 + $0x148] sm:$0xff]
    %v79 = vld [vmem:[#allocation2 + $0x150] sm:$0xff]
    %v80 = vld [vmem:[#allocation2 + $0x158] sm:$0xff]
    %v81 = vld [vmem:[#allocation2 + $0x160] sm:$0xff]
    %v82 = vld [vmem:[#allocation2 + $0x168] sm:$0xff]
    %v83 = vld [vmem:[#allocation2 + $0x170] sm:$0xff]
    %v84 = vld [vmem:[#allocation2 + $0x178] sm:$0xff]
    %v85 = vld [vmem:[#allocation2 + $0x180] sm:$0xff]
    %v86 = vld [vmem:[#allocation2 + $0x188] sm:$0xff]
    %v87 = vld [vmem:[#allocation2 + $0x190] sm:$0xff]
    %v88 = vld [vmem:[#allocation2 + $0x198] sm:$0xff]
    %v89 = vld [vmem:[#allocation2 + $0x1a0] sm:$0xff]
    %v90 = vld [vmem:[#allocation2 + $0x1a8] sm:$0xff]
    %v91 = vld [vmem:[#allocation2 + $0x1b0] sm:$0xff]
    %v92 = vld [vmem:[#allocation2 + $0x1b8] sm:$0xff]
    %v93 = vld [vmem:[#allocation2 + $0x1c0] sm:$0xff]
    %v94 = vld [vmem:[#allocation2 + $0x1c8] sm:$0xff]
    %v95 = vld [vmem:[#allocation2 + $0x1d0] sm:$0xff]
    %v96 = vld [vmem:[#allocation2 + $0x1d8] sm:$0xff]
    %v97 = vld [vmem:[#allocation2 + $0x1e0] sm:$0xff]
    %v98 = vld [vmem:[#allocation2 + $0x1e8] sm:$0xff]
    %v99 = vld [vmem:[#allocation2 + $0x1f0] sm:$0xff]
    %v100 = vld [vmem:[#allocation2 + $0x1f8] sm:$0xff]
    %v101 = vld [vmem:[#allocation2 + $0x200] sm:$0xff]
    %v102 = vld [vmem:[#allocation2 + $0x208] sm:$0xff]
    %v103 = vld [vmem:[#allocation2 + $0x210] sm:$0xff]
    %v104 = vld [vmem:[#allocation2 + $0x218] sm:$0xff]
    %v105 = vld [vmem:[#allocation2 + $0x220] sm:$0xff]
    %v106 = vld [vmem:[#allocation2 + $0x228] sm:$0xff]
    %v107 = vld [vmem:[#allocation2 + $0x230] sm:$0xff]
    %v108 = vld [vmem:[#allocation2 + $0x238] sm:$0xff]
    %v109 = vld [vmem:[#allocation2 + $0x240] sm:$0xff]
    %v110 = vld [vmem:[#allocation2 + $0x248] sm:$0xff]
    %v111 = vld [vmem:[#allocation2 + $0x250] sm:$0xff]
    %v112 = vld [vmem:[#allocation2 + $0x258] sm:$0xff]
    %v113 = vld [vmem:[#allocation2 + $0x260] sm:$0xff]
    %v114 = vld [vmem:[#allocation2 + $0x268] sm:$0xff]
    %v115 = vld [vmem:[#allocation2 + $0x270] sm:$0xff]
    %v116 = vld [vmem:[#allocation2 + $0x278] sm:$0xff]
    %v117 = vld [vmem:[#allocation2 + $0x280] sm:$0xff]
    %v118 = vld [vmem:[#allocation2 + $0x288] sm:$0xff]
    %v119 = vld [vmem:[#allocation2 + $0x290] sm:$0xff]
    %v120 = vld [vmem:[#allocation2 + $0x298] sm:$0xff]
    %v121 = vld [vmem:[#allocation2 + $0x2a0] sm:$0xff]
    %v122 = vld [vmem:[#allocation2 + $0x2a8] sm:$0xff]
    %v123 = vld [vmem:[#allocation2 + $0x2b0] sm:$0xff]
    %v124 = vld [vmem:[#allocation2 + $0x2b8] sm:$0xff]
    %v125 = vld [vmem:[#allocation2 + $0x2c0] sm:$0xff]
    %v126 = vld [vmem:[#allocation2 + $0x2c8] sm:$0xff]
    %v127 = vld [vmem:[#allocation2 + $0x2d0] sm:$0xff]
    %v128 = vld [vmem:[#allocation2 + $0x2d8] sm:$0xff]
    %v129 = vld [vmem:[#allocation2 + $0x2e0] sm:$0xff]
    %v130 = vld [vmem:[#allocation2 + $0x2e8] sm:$0xff]
    %v131 = vld [vmem:[#allocation2 + $0x2f0] sm:$0xff]
    %v132 = vld [vmem:[#allocation2 + $0x2f8] sm:$0xff]
    %v133 = vld [vmem:[#allocation2 + $0x300] sm:$0xff]
    %v134 = vld [vmem:[#allocation2 + $0x308] sm:$0xff]
    %v135 = vld [vmem:[#allocation2 + $0x310] sm:$0xff]
    %v136 = vld [vmem:[#allocation2 + $0x318] sm:$0xff]
    %v137 = vld [vmem:[#allocation2 + $0x320] sm:$0xff]
    %v138 = vld [vmem:[#allocation2 + $0x328] sm:$0xff]
    %v139 = vld [vmem:[#allocation2 + $0x330] sm:$0xff]
    %v140 = vld [vmem:[#allocation2 + $0x338] sm:$0xff]
    %v141 = vld [vmem:[#allocation2 + $0x340] sm:$0xff]
    %v142 = vld [vmem:[#allocation2 + $0x348] sm:$0xff]
    %v143 = vld [vmem:[#allocation2 + $0x350] sm:$0xff]
    %v144 = vld [vmem:[#allocation2 + $0x358] sm:$0xff]
    %v145 = vld [vmem:[#allocation2 + $0x360] sm:$0xff]
    %v146 = vld [vmem:[#allocation2 + $0x368] sm:$0xff]
    %v147 = vld [vmem:[#allocation2 + $0x370] sm:$0xff]
    %v148 = vld [vmem:[#allocation2 + $0x378] sm:$0xff]
    %v149 = vld [vmem:[#allocation2 + $0x380] sm:$0xff]
    %v150 = vld [vmem:[#allocation2 + $0x388] sm:$0xff]
    %v151 = vld [vmem:[#allocation2 + $0x390] sm:$0xff]
    %v152 = vld [vmem:[#allocation2 + $0x398] sm:$0xff]
    %v153 = vld [vmem:[#allocation2 + $0x3a0] sm:$0xff]
    %v154 = vld [vmem:[#allocation2 + $0x3a8] sm:$0xff]
    %v155 = vld [vmem:[#allocation2 + $0x3b0] sm:$0xff]
    %v156 = vld [vmem:[#allocation2 + $0x3b8] sm:$0xff]
    %v157 = vld [vmem:[#allocation2 + $0x3c0] sm:$0xff]
    %v158 = vld [vmem:[#allocation2 + $0x3c8] sm:$0xff]
    %v159 = vld [vmem:[#allocation2 + $0x3d0] sm:$0xff]
    %v160 = vld [vmem:[#allocation2 + $0x3d8] sm:$0xff]
    %v161 = vld [vmem:[#allocation2 + $0x3e0] sm:$0xff]
    %v162 = vld [vmem:[#allocation2 + $0x3e8] sm:$0xff]
    %v163 = vld [vmem:[#allocation2 + $0x3f0] sm:$0xff]
    %v164 = vld [vmem:[#allocation2 + $0x3f8] sm:$0xff]
    %v165 = vld [vmem:[#allocation2 + $0x400] sm:$0xff]
    %v166 = vld [vmem:[#allocation2 + $0x408] sm:$0xff]
    %v167 = vld [vmem:[#allocation2 + $0x410] sm:$0xff]
    %v168 = vld [vmem:[#allocation2 + $0x418] sm:$0xff]
    %v169 = vld [vmem:[#allocation2 + $0x420] sm:$0xff]
    %v170 = vld [vmem:[#allocation2 + $0x428] sm:$0xff]
    %v171 = vld [vmem:[#allocation2 + $0x430] sm:$0xff]
    %v172 = vld [vmem:[#allocation2 + $0x438] sm:$0xff]
    %v173 = vld [vmem:[#allocation2 + $0x440] sm:$0xff]
    %v174 = vld [vmem:[#allocation2 + $0x448] sm:$0xff]
    %v175 = vld [vmem:[#allocation2 + $0x450] sm:$0xff]
    %v176 = vld [vmem:[#allocation2 + $0x458] sm:$0xff]
    %v177 = vld [vmem:[#allocation2 + $0x460] sm:$0xff]
    %v178 = vld [vmem:[#allocation2 + $0x468] sm:$0xff]
    %v179 = vld [vmem:[#allocation2 + $0x470] sm:$0xff]
    %v180 = vld [vmem:[#allocation2 + $0x478] sm:$0xff]
    %v181 = vld [vmem:[#allocation2 + $0x480] sm:$0xff]
    %v182 = vld [vmem:[#allocation2 + $0x488] sm:$0xff]
    %v183 = vld [vmem:[#allocation2 + $0x490] sm:$0xff]
    %v184 = vld [vmem:[#allocation2 + $0x498] sm:$0xff]
    %v185 = vld [vmem:[#allocation2 + $0x4a0] sm:$0xff]
    %v186 = vld [vmem:[#allocation2 + $0x4a8] sm:$0xff]
    %v187 = vld [vmem:[#allocation2 + $0x4b0] sm:$0xff]
    %v188 = vld [vmem:[#allocation2 + $0x4b8] sm:$0xff]
    %v189 = vld [vmem:[#allocation2 + $0x4c0] sm:$0xff]
    %v190 = vld [vmem:[#allocation2 + $0x4c8] sm:$0xff]
    %v191 = vld [vmem:[#allocation2 + $0x4d0] sm:$0xff]
    %v192 = vld [vmem:[#allocation2 + $0x4d8] sm:$0xff]
    %v193 = vld [vmem:[#allocation2 + $0x4e0] sm:$0xff]
    %v194 = vld [vmem:[#allocation2 + $0x4e8] sm:$0xff]
    %v195 = vld [vmem:[#allocation2 + $0x4f0] sm:$0xff]
    %v196 = vld [vmem:[#allocation2 + $0x4f8] sm:$0xff]
    %v197 = vld [vmem:[#allocation2 + $0x500] sm:$0xff]
    %v198 = vld [vmem:[#allocation2 + $0x508] sm:$0xff]
    %v199 = vld [vmem:[#allocation2 + $0x510] sm:$0xff]
    %v200 = vld [vmem:[#allocation2 + $0x518] sm:$0xff]
    %v201 = vld [vmem:[#allocation2 + $0x520] sm:$0xff]
    %v202 = vld [vmem:[#allocation2 + $0x528] sm:$0xff]
    %v203 = vld [vmem:[#allocation2 + $0x530] sm:$0xff]
    %v204 = vld [vmem:[#allocation2 + $0x538] sm:$0xff]
    %v205 = vld [vmem:[#allocation2 + $0x540] sm:$0xff]
    %v206 = vld [vmem:[#allocation2 + $0x548] sm:$0xff]
    %v207 = vld [vmem:[#allocation2 + $0x550] sm:$0xff]
    %v208 = vld [vmem:[#allocation2 + $0x558] sm:$0xff]
    %v209 = vld [vmem:[#allocation2 + $0x560] sm:$0xff]
    %v210 = vld [vmem:[#allocation2 + $0x568] sm:$0xff]
    %v211 = vld [vmem:[#allocation2 + $0x570] sm:$0xff]
    %v212 = vld [vmem:[#allocation2 + $0x578] sm:$0xff]
    %v213 = vld [vmem:[#allocation2 + $0x580] sm:$0xff]
    %v214 = vld [vmem:[#allocation2 + $0x588] sm:$0xff]
    %v215 = vld [vmem:[#allocation2 + $0x590] sm:$0xff]
    %v216 = vld [vmem:[#allocation2 + $0x598] sm:$0xff]
    %v217 = vld [vmem:[#allocation2 + $0x5a0] sm:$0xff]
    %v218 = vld [vmem:[#allocation2 + $0x5a8] sm:$0xff]
    %v219 = vld [vmem:[#allocation2 + $0x5b0] sm:$0xff]
    %v220 = vld [vmem:[#allocation2 + $0x5b8] sm:$0xff]
    %v221 = vld [vmem:[#allocation2 + $0x5c0] sm:$0xff]
    %v222 = vld [vmem:[#allocation2 + $0x5c8] sm:$0xff]
    %v223 = vld [vmem:[#allocation2 + $0x5d0] sm:$0xff]
    %v224 = vld [vmem:[#allocation2 + $0x5d8] sm:$0xff]
    %v225 = vld [vmem:[#allocation2 + $0x5e0] sm:$0xff]
    %v226 = vld [vmem:[#allocation2 + $0x5e8] sm:$0xff]
    %v227 = vld [vmem:[#allocation2 + $0x5f0] sm:$0xff]
    %v228 = vld [vmem:[#allocation2 + $0x5f8] sm:$0xff]
    %v229 = vld [vmem:[#allocation2 + $0x600] sm:$0xff]
    %v230 = vld [vmem:[#allocation2 + $0x608] sm:$0xff]
    %v231 = vld [vmem:[#allocation2 + $0x610] sm:$0xff]
    %v232 = vld [vmem:[#allocation2 + $0x618] sm:$0xff]
    %v233 = vld [vmem:[%s2] sm:$0x3]
    %v235 = vlaneseq
    %v236 = vshrl.u32 %v235, 7
    %v237 = vsub.s32 0, %v236
    %v238 = vrot.slane %v233, %v237
    %v239 = vlaneseq
    %v240 = vshrl.u32 %v239, 7
    %v241 = vsub.s32 1, %v240
    %v242 = vrot.slane %v233, %v241
    %v247 = vcombine.high %v35, %v35
    %v249 = vunpack.c.l.s4 1983009808
    %v250 = vunpack.c.0.s8 %v249
    %v251 = vlaneseq
    %v252 = vshrl.u32 %v251, 7
    %v253 = vsub.s32 %v250, %v252
    %v254 = vrot.slane %v35, %v253
    %v256 = vunpack.c.l.s4 1983009808
    %v257 = vunpack.c.0.s8 %v256
    %v258 = vlaneseq
    %v259 = vshrl.u32 %v258, 7
    %v260 = vsub.s32 %v257, %v259
    %v261 = vrot.slane %v247, %v260
    %v262 = vcombine.high %v254, %v254
    %v263 = vcombine.high %v261, %v261
    %v264 = vcombine.high %v36, %v36
    %v266 = vunpack.c.l.s4 1983009808
    %v267 = vunpack.c.0.s8 %v266
    %v268 = vlaneseq
    %v269 = vshrl.u32 %v268, 7
    %v270 = vsub.s32 %v267, %v269
    %v271 = vrot.slane %v36, %v270
    %v273 = vunpack.c.l.s4 1983009808
    %v274 = vunpack.c.0.s8 %v273
    %v275 = vlaneseq
    %v276 = vshrl.u32 %v275, 7
    %v277 = vsub.s32 %v274, %v276
    %v278 = vrot.slane %v264, %v277
    %v279 = vcombine.high %v271, %v271
    %vm286 = vcmask 130048
    %v287 = vsel %vm286, %v278, 0
    %289 = vmatprep.subr.mxu0 %v38
    %290 = vmatpush1.msra.mxu0 %v37
    %291 = vmatprep.subr.mxu0 %v40
    %292 = vmatpush1.msra.mxu0 %v39
    %293 = vmatprep.subr.mxu0 %v42
    %294 = vmatpush1.msra.mxu0 %v41
    %295 = vmatprep.subr.mxu0 %v44
    %296 = vmatpush1.msra.mxu0 %v43
    %297 = vmatprep.subr.mxu0 %v46
    %298 = vmatpush1.msra.mxu0 %v45
    %299 = vmatprep.subr.mxu0 %v48
    %300 = vmatpush1.msra.mxu0 %v47
    %301 = vmatprep.subr.mxu0 %v50
    %302 = vmatpush1.msra.mxu0 %v49
    %303 = vmatprep.subr.mxu0 %v52
    %304 = vmatpush1.msra.mxu0 %v51
    %305 = vmatprep.subr.mxu0 %v54
    %306 = vmatpush1.msra.mxu0 %v53
    %307 = vmatprep.subr.mxu0 %v56
    %308 = vmatpush1.msra.mxu0 %v55
    %309 = vmatprep.subr.mxu0 %v58
    %310 = vmatpush1.msra.mxu0 %v57
    %311 = vmatprep.subr.mxu0 %v60
    %312 = vmatpush1.msra.mxu0 %v59
    %313 = vmatprep.subr.mxu0 %v62
    %314 = vmatpush1.msra.mxu0 %v61
    %315 = vmatprep.subr.mxu0 %v64
    %316 = vmatpush1.msra.mxu0 %v63
    %317 = vmatprep.subr.mxu0 %v66
    %318 = vmatpush1.msra.mxu0 %v65
    %319 = vmatprep.subr.mxu0 %v68
    %320 = vmatpush1.msra.mxu0 %v67
    %321 = vmatprep.subr.mxu0 %v70
    %322 = vmatpush1.msra.mxu0 %v69
    %323 = vmatprep.subr.mxu0 %v72
    %324 = vmatpush1.msra.mxu0 %v71
    %325 = vmatprep.subr.mxu0 %v74
    %326 = vmatpush1.msra.mxu0 %v73
    %327 = vmatprep.subr.mxu0 %v76
    %328 = vmatpush1.msra.mxu0 %v75
    %329 = vmatprep.subr.mxu0 %v78
    %330 = vmatpush1.msra.mxu0 %v77
    %331 = vmatprep.subr.mxu0 %v80
    %332 = vmatpush1.msra.mxu0 %v79
    %333 = vmatprep.subr.mxu0 %v82
    %334 = vmatpush1.msra.mxu0 %v81
    %335 = vmatprep.subr.mxu0 %v84
    %336 = vmatpush1.msra.mxu0 %v83
    %337 = vmatprep.subr.mxu0 %v86
    %338 = vmatpush1.msra.mxu0 %v85
    %339 = vmatprep.subr.mxu0 %v88
    %340 = vmatpush1.msra.mxu0 %v87
    %341 = vmatprep.subr.mxu0 %v90
    %342 = vmatpush1.msra.mxu0 %v89
    %343 = vmatprep.subr.mxu0 %v92
    %344 = vmatpush1.msra.mxu0 %v91
    %345 = vmatprep.subr.mxu0 %v94
    %346 = vmatpush1.msra.mxu0 %v93
    %347 = vmatprep.subr.mxu0 %v96
    %348 = vmatpush1.msra.mxu0 %v95
    %349 = vmatprep.subr.mxu0 %v98
    %350 = vmatpush1.msra.mxu0 %v97
    %351 = vmatprep.subr.mxu0 %v100
    %352 = vmatpush1.msra.mxu0 %v99
    %353 = vmatprep.mubr.f32.mxu0 %v262
    %354 = vmatmul.mubr.f32.gmra.mrb[0].mxu0 %v254
    %v355 = vpop.f32.mrb[0].mxu0
    %v356 = vadd.f32 %v238, %v355
    %v357 = vpop.f32.mrb[0].mxu0
    %v358 = vadd.f32 %v242, %v357
    %359 = vdwg.mxu0
    %360 = vmatprep.subr.mxu0 %v102
    %361 = vmatpush1.msra.mxu0 %v101
    %362 = vmatprep.subr.mxu0 %v104
    %363 = vmatpush1.msra.mxu0 %v103
    %364 = vmatprep.subr.mxu0 %v106
    %365 = vmatpush1.msra.mxu0 %v105
    %366 = vmatprep.subr.mxu0 %v108
    %367 = vmatpush1.msra.mxu0 %v107
    %368 = vmatprep.subr.mxu0 %v110
    %369 = vmatpush1.msra.mxu0 %v109
    %370 = vmatprep.subr.mxu0 %v112
    %371 = vmatpush1.msra.mxu0 %v111
    %372 = vmatprep.subr.mxu0 %v114
    %373 = vmatpush1.msra.mxu0 %v113
    %374 = vmatprep.subr.mxu0 %v116
    %375 = vmatpush1.msra.mxu0 %v115
    %376 = vmatprep.subr.mxu0 %v118
    %377 = vmatpush1.msra.mxu0 %v117
    %378 = vmatprep.subr.mxu0 %v120
    %379 = vmatpush1.msra.mxu0 %v119
    %380 = vmatprep.subr.mxu0 %v122
    %381 = vmatpush1.msra.mxu0 %v121
    %382 = vmatprep.subr.mxu0 %v124
    %383 = vmatpush1.msra.mxu0 %v123
    %384 = vmatprep.subr.mxu0 %v126
    %385 = vmatpush1.msra.mxu0 %v125
    %386 = vmatprep.subr.mxu0 %v128
    %387 = vmatpush1.msra.mxu0 %v127
    %388 = vmatprep.subr.mxu0 %v130
    %389 = vmatpush1.msra.mxu0 %v129
    %390 = vmatprep.subr.mxu0 %v132
    %391 = vmatpush1.msra.mxu0 %v131
    %392 = vmatprep.subr.mxu0 %v134
    %393 = vmatpush1.msra.mxu0 %v133
    %394 = vmatprep.subr.mxu0 %v136
    %395 = vmatpush1.msra.mxu0 %v135
    %396 = vmatprep.subr.mxu0 %v138
    %397 = vmatpush1.msra.mxu0 %v137
    %398 = vmatprep.subr.mxu0 %v140
    %399 = vmatpush1.msra.mxu0 %v139
    %400 = vmatprep.subr.mxu0 %v142
    %401 = vmatpush1.msra.mxu0 %v141
    %402 = vmatprep.subr.mxu0 %v144
    %403 = vmatpush1.msra.mxu0 %v143
    %404 = vmatprep.subr.mxu0 %v146
    %405 = vmatpush1.msra.mxu0 %v145
    %406 = vmatprep.subr.mxu0 %v148
    %407 = vmatpush1.msra.mxu0 %v147
    %408 = vmatprep.subr.mxu0 %v150
    %409 = vmatpush1.msra.mxu0 %v149
    %410 = vmatprep.subr.mxu0 %v152
    %411 = vmatpush1.msra.mxu0 %v151
    %412 = vmatprep.subr.mxu0 %v154
    %413 = vmatpush1.msra.mxu0 %v153
    %414 = vmatprep.subr.mxu0 %v156
    %415 = vmatpush1.msra.mxu0 %v155
    %416 = vmatprep.subr.mxu0 %v158
    %417 = vmatpush1.msra.mxu0 %v157
    %418 = vmatprep.subr.mxu0 %v160
    %419 = vmatpush1.msra.mxu0 %v159
    %420 = vmatprep.subr.mxu0 %v162
    %421 = vmatpush1.msra.mxu0 %v161
    %422 = vmatprep.subr.mxu0 %v164
    %423 = vmatpush1.msra.mxu0 %v163
    %424 = vmatprep.mubr.f32.mxu0 %v263
    %425 = vmatmul.mubr.f32.gmra.mrb[0].mxu0 %v261
    %v426 = vpop.f32.mrb[0].mxu0
    %v427 = vadd.f32 %v356, %v426
    %v428 = vpop.f32.mrb[0].mxu0
    %v429 = vadd.f32 %v358, %v428
    %430 = vdwg.mxu0
    %431 = vmatprep.subr.mxu0 %v166
    %432 = vmatpush1.msra.mxu0 %v165
    %433 = vmatprep.subr.mxu0 %v168
    %434 = vmatpush1.msra.mxu0 %v167
    %435 = vmatprep.subr.mxu0 %v170
    %436 = vmatpush1.msra.mxu0 %v169
    %437 = vmatprep.subr.mxu0 %v172
    %438 = vmatpush1.msra.mxu0 %v171
    %439 = vmatprep.subr.mxu0 %v174
    %440 = vmatpush1.msra.mxu0 %v173
    %441 = vmatprep.subr.mxu0 %v176
    %442 = vmatpush1.msra.mxu0 %v175
    %443 = vmatprep.subr.mxu0 %v178
    %444 = vmatpush1.msra.mxu0 %v177
    %445 = vmatprep.subr.mxu0 %v180
    %446 = vmatpush1.msra.mxu0 %v179
    %447 = vmatprep.subr.mxu0 %v182
    %448 = vmatpush1.msra.mxu0 %v181
    %449 = vmatprep.subr.mxu0 %v184
    %450 = vmatpush1.msra.mxu0 %v183
    %451 = vmatprep.subr.mxu0 %v186
    %452 = vmatpush1.msra.mxu0 %v185
    %453 = vmatprep.subr.mxu0 %v188
    %454 = vmatpush1.msra.mxu0 %v187
    %455 = vmatprep.subr.mxu0 %v190
    %456 = vmatpush1.msra.mxu0 %v189
    %457 = vmatprep.subr.mxu0 %v192
    %458 = vmatpush1.msra.mxu0 %v191
    %459 = vmatprep.subr.mxu0 %v194
    %460 = vmatpush1.msra.mxu0 %v193
    %461 = vmatprep.subr.mxu0 %v196
    %462 = vmatpush1.msra.mxu0 %v195
    %463 = vmatprep.subr.mxu0 %v198
    %464 = vmatpush1.msra.mxu0 %v197
    %465 = vmatprep.subr.mxu0 %v200
    %466 = vmatpush1.msra.mxu0 %v199
    %467 = vmatprep.subr.mxu0 %v202
    %468 = vmatpush1.msra.mxu0 %v201
    %469 = vmatprep.subr.mxu0 %v204
    %470 = vmatpush1.msra.mxu0 %v203
    %471 = vmatprep.subr.mxu0 %v206
    %472 = vmatpush1.msra.mxu0 %v205
    %473 = vmatprep.subr.mxu0 %v208
    %474 = vmatpush1.msra.mxu0 %v207
    %475 = vmatprep.subr.mxu0 %v210
    %476 = vmatpush1.msra.mxu0 %v209
    %477 = vmatprep.subr.mxu0 %v212
    %478 = vmatpush1.msra.mxu0 %v211
    %479 = vmatprep.subr.mxu0 %v214
    %480 = vmatpush1.msra.mxu0 %v213
    %481 = vmatprep.subr.mxu0 %v216
    %482 = vmatpush1.msra.mxu0 %v215
    %483 = vmatprep.subr.mxu0 %v218
    %484 = vmatpush1.msra.mxu0 %v217
    %485 = vmatprep.subr.mxu0 %v220
    %486 = vmatpush1.msra.mxu0 %v219
    %487 = vmatprep.subr.mxu0 %v222
    %488 = vmatpush1.msra.mxu0 %v221
    %489 = vmatprep.subr.mxu0 %v224
    %490 = vmatpush1.msra.mxu0 %v223
    %491 = vmatprep.subr.mxu0 %v226
    %492 = vmatpush1.msra.mxu0 %v225
    %493 = vmatprep.subr.mxu0 %v228
    %494 = vmatpush1.msra.mxu0 %v227
    %495 = vmatprep.mubr.f32.mxu0 %v279
    %496 = vmatmul.mubr.f32.gmra.mrb[0].mxu0 %v271
    %v497 = vpop.f32.mrb[0].mxu0
    %v498 = vadd.f32 %v427, %v497
    %v499 = vpop.f32.mrb[0].mxu0
    %v500 = vadd.f32 %v429, %v499
    %501 = vdwg.mxu0
    %502 = vmatprep.subr.mxu0 %v230
    %503 = vmatpush1.msra.mxu0 %v229
    %504 = vmatprep.subr.mxu0 %v232
    %505 = vmatpush1.msra.mxu0 %v231
    %506 = vmatprep.subr.mxu0 0.0
    %507 = vmatpush1.msra.mxu0 0.0
    %508 = vmatprep.subr.mxu0 0.0
    %509 = vmatpush1.msra.mxu0 0.0
    %510 = vmatprep.subr.mxu0 0.0
    %511 = vmatpush1.msra.mxu0 0.0
    %512 = vmatprep.subr.mxu0 0.0
    %513 = vmatpush1.msra.mxu0 0.0
    %514 = vmatprep.subr.mxu0 0.0
    %515 = vmatpush1.msra.mxu0 0.0
    %516 = vmatprep.subr.mxu0 0.0
    %517 = vmatpush1.msra.mxu0 0.0
    %518 = vmatprep.subr.mxu0 0.0
    %519 = vmatpush1.msra.mxu0 0.0
    %520 = vmatprep.subr.mxu0 0.0
    %521 = vmatpush1.msra.mxu0 0.0
    %522 = vmatprep.subr.mxu0 0.0
    %523 = vmatpush1.msra.mxu0 0.0
    %524 = vmatprep.subr.mxu0 0.0
    %525 = vmatpush1.msra.mxu0 0.0
    %526 = vmatprep.subr.mxu0 0.0
    %527 = vmatpush1.msra.mxu0 0.0
    %528 = vmatprep.subr.mxu0 0.0
    %529 = vmatpush1.msra.mxu0 0.0
    %530 = vmatprep.subr.mxu0 0.0
    %531 = vmatpush1.msra.mxu0 0.0
    %532 = vmatprep.subr.mxu0 0.0
    %533 = vmatpush1.msra.mxu0 0.0
    %534 = vmatprep.subr.mxu0 0.0
    %535 = vmatpush1.msra.mxu0 0.0
    %536 = vmatprep.subr.mxu0 0.0
    %537 = vmatpush1.msra.mxu0 0.0
    %538 = vmatprep.subr.mxu0 0.0
    %539 = vmatpush1.msra.mxu0 0.0
    %540 = vmatprep.subr.mxu0 0.0
    %541 = vmatpush1.msra.mxu0 0.0
    %542 = vmatprep.subr.mxu0 0.0
    %543 = vmatpush1.msra.mxu0 0.0
    %544 = vmatprep.subr.mxu0 0.0
    %545 = vmatpush1.msra.mxu0 0.0
    %546 = vmatprep.subr.mxu0 0.0
    %547 = vmatpush1.msra.mxu0 0.0
    %548 = vmatprep.subr.mxu0 0.0
    %549 = vmatpush1.msra.mxu0 0.0
    %550 = vmatprep.subr.mxu0 0.0
    %551 = vmatpush1.msra.mxu0 0.0
    %552 = vmatprep.subr.mxu0 0.0
    %553 = vmatpush1.msra.mxu0 0.0
    %554 = vmatprep.subr.mxu0 0.0
    %555 = vmatpush1.msra.mxu0 0.0
    %556 = vmatprep.subr.mxu0 0.0
    %557 = vmatpush1.msra.mxu0 0.0
    %558 = vmatprep.subr.mxu0 0.0
    %559 = vmatpush1.msra.mxu0 0.0
    %560 = vmatprep.subr.mxu0 0.0
    %561 = vmatpush1.msra.mxu0 0.0
    %562 = vmatprep.subr.mxu0 0.0
    %563 = vmatpush1.msra.mxu0 0.0
    %564 = vmatprep.subr.mxu0 0.0
    %565 = vmatpush1.msra.mxu0 0.0
    %566 = vmatprep.mubr.f32.mxu0 0.0
    %567 = vmatmul.mubr.f32.gmra.mrb[0].mxu0 %v287
    %v568 = vpop.f32.mrb[0].mxu0
    %v569 = vadd.f32 %v498, %v568
    %v570 = vpop.f32.mrb[0].mxu0
    %v571 = vadd.f32 %v500, %v570
    %572 = vdwg.mxu0
    %v573 = vtanh.pop %v569
    %v574 = vtanh.pop %v571
    %v575 = vld [vmem:[%s3] sm:$0xff]
    %v576 = vld [vmem:[%s3 + $0x8] sm:$0xff]
    %v577 = vld [vmem:[%s3 + $0x10] sm:$0xff]
    %v578 = vld [vmem:[%s3 + $0x18] sm:$0xff]
    %v579 = vld [vmem:[%s3 + $0x20] sm:$0xff]
    %v580 = vld [vmem:[%s3 + $0x28] sm:$0xff]
    %v581 = vld [vmem:[%s3 + $0x30] sm:$0xff]
    %v582 = vld [vmem:[%s3 + $0x38] sm:$0xff]
    %v583 = vld [vmem:[%s3 + $0x40] sm:$0xff]
    %v584 = vld [vmem:[%s3 + $0x48] sm:$0xff]
    %v585 = vld [vmem:[%s3 + $0x50] sm:$0xff]
    %v586 = vld [vmem:[%s3 + $0x58] sm:$0xff]
    %v587 = vld [vmem:[%s3 + $0x60] sm:$0xff]
    %v588 = vld [vmem:[%s3 + $0x68] sm:$0xff]
    %v589 = vld [vmem:[%s3 + $0x70] sm:$0xff]
    %v590 = vld [vmem:[%s3 + $0x78] sm:$0xff]
    %v591 = vld [vmem:[%s3 + $0x80] sm:$0xff]
    %v592 = vld [vmem:[%s3 + $0x88] sm:$0xff]
    %v593 = vld [vmem:[%s3 + $0x90] sm:$0xff]
    %v594 = vld [vmem:[%s3 + $0x98] sm:$0xff]
    %v595 = vld [vmem:[%s3 + $0xa0] sm:$0xff]
    %v596 = vld [vmem:[%s3 + $0xa8] sm:$0xff]
    %v597 = vld [vmem:[%s3 + $0xb0] sm:$0xff]
    %v598 = vld [vmem:[%s3 + $0xb8] sm:$0xff]
    %v599 = vld [vmem:[%s3 + $0xc0] sm:$0xff]
    %v600 = vld [vmem:[%s3 + $0xc8] sm:$0xff]
    %v601 = vld [vmem:[%s3 + $0xd0] sm:$0xff]
    %v602 = vld [vmem:[%s3 + $0xd8] sm:$0xff]
    %v603 = vld [vmem:[%s3 + $0xe0] sm:$0xff]
    %v604 = vld [vmem:[%s3 + $0xe8] sm:$0xff]
    %v605 = vld [vmem:[%s3 + $0xf0] sm:$0xff]
    %v606 = vld [vmem:[%s3 + $0xf8] sm:$0xff]
    %v607 = vld [vmem:[%s4] sm:$0x1]
    %v609 = vlaneseq
    %v610 = vshrl.u32 %v609, 7
    %v611 = vsub.s32 0, %v610
    %v612 = vrot.slane %v607, %v611
    %614 = vmatprep.subr.mxu0 0.0
    %615 = vmatpush1.msra.mxu0 %v575
    %616 = vmatprep.subr.mxu0 0.0
    %617 = vmatpush1.msra.mxu0 %v576
    %618 = vmatprep.subr.mxu0 0.0
    %619 = vmatpush1.msra.mxu0 %v577
    %620 = vmatprep.subr.mxu0 0.0
    %621 = vmatpush1.msra.mxu0 %v578
    %622 = vmatprep.subr.mxu0 0.0
    %623 = vmatpush1.msra.mxu0 %v579
    %624 = vmatprep.subr.mxu0 0.0
    %625 = vmatpush1.msra.mxu0 %v580
    %626 = vmatprep.subr.mxu0 0.0
    %627 = vmatpush1.msra.mxu0 %v581
    %628 = vmatprep.subr.mxu0 0.0
    %629 = vmatpush1.msra.mxu0 %v582
    %630 = vmatprep.subr.mxu0 0.0
    %631 = vmatpush1.msra.mxu0 %v583
    %632 = vmatprep.subr.mxu0 0.0
    %633 = vmatpush1.msra.mxu0 %v584
    %634 = vmatprep.subr.mxu0 0.0
    %635 = vmatpush1.msra.mxu0 %v585
    %636 = vmatprep.subr.mxu0 0.0
    %637 = vmatpush1.msra.mxu0 %v586
    %638 = vmatprep.subr.mxu0 0.0
    %639 = vmatpush1.msra.mxu0 %v587
    %640 = vmatprep.subr.mxu0 0.0
    %641 = vmatpush1.msra.mxu0 %v588
    %642 = vmatprep.subr.mxu0 0.0
    %643 = vmatpush1.msra.mxu0 %v589
    %644 = vmatprep.subr.mxu0 0.0
    %645 = vmatpush1.msra.mxu0 %v590
    %646 = vmatprep.subr.mxu0 0.0
    %647 = vmatpush1.msra.mxu0 %v591
    %648 = vmatprep.subr.mxu0 0.0
    %649 = vmatpush1.msra.mxu0 %v592
    %650 = vmatprep.subr.mxu0 0.0
    %651 = vmatpush1.msra.mxu0 %v593
    %652 = vmatprep.subr.mxu0 0.0
    %653 = vmatpush1.msra.mxu0 %v594
    %654 = vmatprep.subr.mxu0 0.0
    %655 = vmatpush1.msra.mxu0 %v595
    %656 = vmatprep.subr.mxu0 0.0
    %657 = vmatpush1.msra.mxu0 %v596
    %658 = vmatprep.subr.mxu0 0.0
    %659 = vmatpush1.msra.mxu0 %v597
    %660 = vmatprep.subr.mxu0 0.0
    %661 = vmatpush1.msra.mxu0 %v598
    %662 = vmatprep.subr.mxu0 0.0
    %663 = vmatpush1.msra.mxu0 %v599
    %664 = vmatprep.subr.mxu0 0.0
    %665 = vmatpush1.msra.mxu0 %v600
    %666 = vmatprep.subr.mxu0 0.0
    %667 = vmatpush1.msra.mxu0 %v601
    %668 = vmatprep.subr.mxu0 0.0
    %669 = vmatpush1.msra.mxu0 %v602
    %670 = vmatprep.subr.mxu0 0.0
    %671 = vmatpush1.msra.mxu0 %v603
    %672 = vmatprep.subr.mxu0 0.0
    %673 = vmatpush1.msra.mxu0 %v604
    %674 = vmatprep.subr.mxu0 0.0
    %675 = vmatpush1.msra.mxu0 %v605
    %676 = vmatprep.subr.mxu0 0.0
    %677 = vmatpush1.msra.mxu0 %v606
    %678 = vmatprep.mubr.f32.mxu0 %v574
    %679 = vmatmul.mubr.f32.gmra.mrb[0].mxu0 %v573
    %v680 = vpop.f32.mrb[0].mxu0
    %v681 = vadd.f32 %v612, %v680
    %v682 = vpop.f32.mrb[0].mxu0
    %683 = vdwg.mxu0
    %vm684 = vcmask 1041408
    %v685 = vsel %vm684, %v681, -inf
    %686 = vmax.xlane.f32.xlu0 %v685
    %v687 = vpop.xlane.xlu0 %686
    %v688 = vsub.f32 %v681, %v687
    %v689 = vmul.f32 %v688, 1.442695
    %v690 = vpow.pop %v689
    %v691 = vsel %vm684, %v690, 0.0
    %692 = vadd.xlane.f32.xlu0 %v691
    %v693 = vpop.xlane.xlu0 %692
    %v694 = vlog2.pop %v693
    %v695 = vmul.f32 %v694, 0.6931472
    %v696 = vadd.f32 %v695, %v687
    %v697 = vsub.f32 %v681, %v696
    %698 = vst [vmem:[#allocation5] sm:$0x3] %v697
    // Predicated region
    $region26: #{netfull_forward.1} parent=1 // pred_check
      _
    $region27: #{netfull_forward.1} parent=1 // pred_check_branch
      %700 = sbr.rel (0) target = $region29
    $region28: #{netfull_forward.1} parent=1 // pred_region
      %s702 = ssub.s32 32, 32
      %703 = vsyncadd [#allocation4], %s702
      %s705 = sshll.u32 [#allocation5], 4
      %s706 = int_to_ptr.vmem [resolvable:$true] %s705
      %708 = dma.vmem_to_hbm [thread:$0]  %s706, 32, %s5, [#allocation4]
    $region29: #{netfull_forward.1} parent=1 // pred_fallthru
      _
    // Predicated region
    $region30: #{netfull_forward.1} parent=1 // pred_check
      _
    $region31: #{netfull_forward.1} parent=1 // pred_check_branch
      %710 = sbr.rel (0) target = $region33
    $region32: #{netfull_forward.1} parent=1 // pred_region
      %711 = dma.done [#allocation4], 32
    $region33: #{netfull_forward.1} parent=1 // pred_fallthru
      _
    %712 = vsyncpa [#allocation3], 1
    %713 = vsyncpa [#allocation4], 1

</llo_original>
